<compile_context>
chip_gen: v6e
topology: v6e:2x2x1
jax: 0.10.0
libtpu: 0.0.40
codegen_flags: <defaults>
</compile_context>

<pallas_src>
import functools
import numpy as np
import jax
import jax.numpy as jnp
from jax.experimental import pallas as pl
from jax.experimental.pallas import tpu as pltpu


# ---------------------------------------------------------------------------
# Mask / degree construction (setup glue, mirrors MaskedLinear._get_mask_and_degrees
# with random_mask=False, is_output=False)
# ---------------------------------------------------------------------------
def _get_input_degrees(in_features):
    return np.arange(1, in_features + 1)


def _hidden_mask_and_degrees(in_degrees, out_features, autoregressive_features):
    max_ = max(1, autoregressive_features - 1)
    min_ = min(1, autoregressive_features - 1)
    out_degrees = np.arange(out_features) % max_ + min_
    mask = (out_degrees[..., None] >= in_degrees[None, :]).astype(np.float32)
    return mask, out_degrees


def _round_up(x, m):
    return ((x + m - 1) // m) * m


# ---------------------------------------------------------------------------
# Pallas kernel: whole residual block fused on a batch tile.
#   x_ref   : [TB, F_pad]           input tile (also residual source)
#   ctx_ref : [TB, C_pad]           context tile
#   w0c_ref : [F_pad + C_pad, F_pad] pre-masked, pre-transposed, fused (W0.T || Wc.T)
#   b0c_ref : [1, F_pad]            b0 + bc
#   w1_ref  : [F_pad, F_pad]        pre-masked, pre-transposed W1.T
#   b1_ref  : [1, F_pad]
#   o_ref   : [TB, F_pad]
# ---------------------------------------------------------------------------
def masked_resblock_kernel(x_ref, ctx_ref, w0c_ref, b0c_ref, w1_ref, b1_ref, o_ref):
    x = x_ref[...]                                       # [TB, F_pad]
    h = jnp.maximum(x, 0.0)                              # relu

    # Fused first masked linear + context linear: one MXU pass over [h, ctx].
    hc = jnp.concatenate([h, ctx_ref[...]], axis=-1)     # [TB, F_pad + C_pad]
    t = jnp.dot(hc, w0c_ref[...], preferred_element_type=jnp.float32) + b0c_ref[...]

    t = jnp.maximum(t, 0.0)                              # relu
    # dropout(p=0.0) == identity; batch norm disabled in default config.
    # TODO(synk): dropout with p>0 / BatchNorm1d not implemented (off by default).

    t = jnp.dot(t, w1_ref[...], preferred_element_type=jnp.float32) + b1_ref[...]

    o_ref[...] = x + t                                   # residual connection


def masked_residual_block(x, context, params, *, block_batch=256):
    """x: [B, F] f32, context: [B, C] f32.

    params = (w0, m0, b0, wc, bc, w1, m1, b1) in torch nn.Linear layout
    (weights [out_features, in_features], biases [out_features]).
    """
    w0, m0, b0, wc, bc, w1, m1, b1 = params
    B, F = x.shape
    C = context.shape[1]

    # Lane-dense padding of feature/context dims; sublane-aligned batch tile.
    F_pad = _round_up(F, 128)
    C_pad = _round_up(C, 128)
    TB = min(block_batch, _round_up(B, 8))
    B_pad = _round_up(B, TB)

    f32 = jnp.float32

    # ---- static weight prep: pre-mask, pre-transpose to [in, out], pre-fuse, pad ----
    w0m_t = (w0 * m0).T                                   # [F, F]   (in x out)
    wc_t = wc.T                                           # [C, F]
    w0c = jnp.zeros((F_pad + C_pad, F_pad), f32)
    w0c = w0c.at[:F, :F].set(w0m_t)
    w0c = w0c.at[F_pad:F_pad + C, :F].set(wc_t)
    b0c = jnp.zeros((1, F_pad), f32).at[0, :F].set(jnp.reshape(b0, (F,)) + jnp.reshape(bc, (F,)))

    w1m_t = jnp.zeros((F_pad, F_pad), f32).at[:F, :F].set((w1 * m1).T)
    b1p = jnp.zeros((1, F_pad), f32).at[0, :F].set(jnp.reshape(b1, (F,)))

    # ---- pad activations (zero padding is exact: padded weight rows/cols are zero) ----
    xp = jnp.zeros((B_pad, F_pad), f32).at[:B, :F].set(x)
    cp = jnp.zeros((B_pad, C_pad), f32).at[:B, :C].set(context)

    # ---- VMEM budget: resident weights + double-buffered activation tiles + headroom ----
    weight_bytes = (w0c.size + w1m_t.size + b0c.size + b1p.size) * 4
    act_bytes = 2 * TB * (F_pad + C_pad + F_pad) * 4
    vmem_limit = int(min(100 << 20, max(16 << 20, weight_bytes + act_bytes + (2 << 20))))

    grid = (B_pad // TB,)

    out = pl.pallas_call(
        masked_resblock_kernel,
        out_shape=jax.ShapeDtypeStruct((B_pad, F_pad), f32),
        grid=grid,
        in_specs=[
            pl.BlockSpec((TB, F_pad), lambda i: (i, 0)),            # x tile
            pl.BlockSpec((TB, C_pad), lambda i: (i, 0)),            # context tile
            pl.BlockSpec((F_pad + C_pad, F_pad), lambda i: (0, 0)),  # fused W (resident)
            pl.BlockSpec((1, F_pad), lambda i: (0, 0)),              # fused bias
            pl.BlockSpec((F_pad, F_pad), lambda i: (0, 0)),          # W1 (resident)
            pl.BlockSpec((1, F_pad), lambda i: (0, 0)),              # b1
        ],
        out_specs=pl.BlockSpec((TB, F_pad), lambda i: (i, 0)),
        compiler_params=pltpu.CompilerParams(
            dimension_semantics=("parallel",),
            vmem_limit_bytes=vmem_limit,
        ),
    )(xp, cp, w0c, b0c, w1m_t, b1p)

    return out[:B, :F]


# ---------------------------------------------------------------------------
# Pure-JAX reference (mirrors the PyTorch forward exactly)
# ---------------------------------------------------------------------------
def reference(x, context, params):
    w0, m0, b0, wc, bc, w1, m1, b1 = params
    t = jax.nn.relu(x)
    t = t @ (w0 * m0).T + b0
    t = t + context @ wc.T + bc
    t = jax.nn.relu(t)
    t = t @ (w1 * m1).T + b1
    return x + t


if __name__ == "__main__":
    # Small deterministic setup
    autoregressive_features = 4
    features = 32          # hidden width == len(in_degrees)
    context_features = 16
    batch = 8

    # in_degrees as produced by a preceding hidden MaskedLinear of the same width
    max_ = max(1, autoregressive_features - 1)
    min_ = min(1, autoregressive_features - 1)
    in_degrees = np.arange(features) % max_ + min_

    mask0, deg0 = _hidden_mask_and_degrees(in_degrees, features, autoregressive_features)
    mask1, deg1 = _hidden_mask_and_degrees(deg0, features, autoregressive_features)
    assert np.all(deg1 >= in_degrees), "output degrees must not be less than input degrees"

    key = jax.random.PRNGKey(0)
    k = jax.random.split(key, 8)
    bound = 1.0 / np.sqrt(features)
    cbound = 1.0 / np.sqrt(context_features)

    w0 = jax.random.uniform(k[0], (features, features), jnp.float32, -bound, bound)
    b0 = jax.random.uniform(k[1], (features,), jnp.float32, -bound, bound)
    wc = jax.random.uniform(k[2], (features, context_features), jnp.float32, -cbound, cbound)
    bc = jax.random.uniform(k[3], (features,), jnp.float32, -cbound, cbound)
    # zero_initialization=True -> last layer uniform(-1e-3, 1e-3)
    w1 = jax.random.uniform(k[4], (features, features), jnp.float32, -1e-3, 1e-3)
    b1 = jax.random.uniform(k[5], (features,), jnp.float32, -1e-3, 1e-3)

    x = jax.random.normal(k[6], (batch, features), jnp.float32)
    context = jax.random.normal(k[7], (batch, context_features), jnp.float32)

    m0 = jnp.asarray(mask0)
    m1 = jnp.asarray(mask1)
    params = (w0, m0, b0, wc, bc, w1, m1, b1)

    run = jax.jit(functools.partial(masked_residual_block, block_batch=256))
    out = run(x, context, params)
    out = jax.block_until_ready(out)

    ref = reference(x, context, params)
    np.testing.assert_allclose(np.asarray(out), np.asarray(ref), rtol=1e-4, atol=1e-5)
    print("KERNEL_OK")
</pallas_src>

<mosaic_0001>
module attributes {stable_mosaic.version = 11 : i64} {
  func.func @masked_resblock_kernel(%arg0: i32, %arg1: memref<8x128xf32, #tpu.memory_space<vmem>>, %arg2: memref<8x128xf32, #tpu.memory_space<vmem>>, %arg3: memref<256x128xf32, #tpu.memory_space<vmem>>, %arg4: memref<1x128xf32, #tpu.memory_space<vmem>>, %arg5: memref<128x128xf32, #tpu.memory_space<vmem>>, %arg6: memref<1x128xf32, #tpu.memory_space<vmem>>, %arg7: memref<8x128xf32, #tpu.memory_space<vmem>>) attributes {dimension_semantics = [#tpu.dimension_semantics<parallel>], iteration_bounds = array<i64: 1>, scalar_prefetch = 0 : i64, scratch_operands = 0 : i64, tpu.core_type = #tpu.core_type<tc>, window_params = [{transform_indices = @transform_0, window_bounds = array<i64: 8, 128>}, {transform_indices = @transform_1, window_bounds = array<i64: 8, 128>}, {pipeline_mode = #tpu.pipeline_mode<synchronous>, transform_indices = @transform_2, window_bounds = array<i64: 256, 128>}, {pipeline_mode = #tpu.pipeline_mode<synchronous>, transform_indices = @transform_3, window_bounds = array<i64: 1, 128>}, {pipeline_mode = #tpu.pipeline_mode<synchronous>, transform_indices = @transform_4, window_bounds = array<i64: 128, 128>}, {pipeline_mode = #tpu.pipeline_mode<synchronous>, transform_indices = @transform_5, window_bounds = array<i64: 1, 128>}, {transform_indices = @transform_6, window_bounds = array<i64: 8, 128>}]} {
    %c0 = arith.constant 0 : index
    %c0_0 = arith.constant 0 : index
    %0 = vector.load %arg1[%c0, %c0_0] : memref<8x128xf32, #tpu.memory_space<vmem>>, vector<8x128xf32>
    %cst = arith.constant 0.000000e+00 : f32
    %1 = vector.broadcast %cst : f32 to vector<8x128xf32>
    %2 = arith.maximumf %0, %1 : vector<8x128xf32>
    %c0_1 = arith.constant 0 : index
    %c0_2 = arith.constant 0 : index
    %3 = vector.load %arg2[%c0_1, %c0_2] : memref<8x128xf32, #tpu.memory_space<vmem>>, vector<8x128xf32>
    %4 = tpu.concatenate %2, %3 in 1 : vector<8x128xf32>, vector<8x128xf32> -> vector<8x256xf32>
    %c0_3 = arith.constant 0 : index
    %c0_4 = arith.constant 0 : index
    %5 = vector.load %arg3[%c0_3, %c0_4] : memref<256x128xf32, #tpu.memory_space<vmem>>, vector<256x128xf32>
    %cst_5 = arith.constant dense<0.000000e+00> : vector<8x128xf32>
    %6 = tpu.matmul %4, %5, %cst_5 {dimension_numbers = #tpu.dot_dimension_numbers<[1], [0], [0], [1], [0, 0, 1, 1], [], []>} : vector<8x256xf32>, vector<256x128xf32>, vector<8x128xf32> -> vector<8x128xf32>
    %c0_6 = arith.constant 0 : index
    %c0_7 = arith.constant 0 : index
    %7 = vector.load %arg4[%c0_6, %c0_7] : memref<1x128xf32, #tpu.memory_space<vmem>>, vector<1x128xf32>
    %8 = vector.broadcast %7 : vector<1x128xf32> to vector<8x128xf32>
    %9 = arith.addf %6, %8 : vector<8x128xf32>
    %cst_8 = arith.constant 0.000000e+00 : f32
    %10 = vector.broadcast %cst_8 : f32 to vector<8x128xf32>
    %11 = arith.maximumf %9, %10 : vector<8x128xf32>
    %c0_9 = arith.constant 0 : index
    %c0_10 = arith.constant 0 : index
    %12 = vector.load %arg5[%c0_9, %c0_10] : memref<128x128xf32, #tpu.memory_space<vmem>>, vector<128x128xf32>
    %cst_11 = arith.constant dense<0.000000e+00> : vector<8x128xf32>
    %13 = tpu.matmul %11, %12, %cst_11 {dimension_numbers = #tpu.dot_dimension_numbers<[1], [0], [0], [1], [0, 0, 1, 1], [], []>} : vector<8x128xf32>, vector<128x128xf32>, vector<8x128xf32> -> vector<8x128xf32>
    %c0_12 = arith.constant 0 : index
    %c0_13 = arith.constant 0 : index
    %14 = vector.load %arg6[%c0_12, %c0_13] : memref<1x128xf32, #tpu.memory_space<vmem>>, vector<1x128xf32>
    %15 = vector.broadcast %14 : vector<1x128xf32> to vector<8x128xf32>
    %16 = arith.addf %13, %15 : vector<8x128xf32>
    %17 = arith.addf %0, %16 : vector<8x128xf32>
    %c0_14 = arith.constant 0 : index
    %c0_15 = arith.constant 0 : index
    %18 = vector.load %arg7[%c0_14, %c0_15] : memref<8x128xf32, #tpu.memory_space<vmem>>, vector<8x128xf32>
    tpu.vector_store %arg7[%c0_14, %c0_15], %17 {strides = array<i32>} : memref<8x128xf32, #tpu.memory_space<vmem>>, vector<8x128xf32>,
    return
  }
  func.func @transform_0(%arg0: i32) -> (i32, i32) {
    %c0_i32 = arith.constant 0 : i32
    %c0_i32_0 = arith.constant 0 : i32
    return %arg0, %c0_i32 : i32, i32
  }
  func.func @transform_1(%arg0: i32) -> (i32, i32) {
    %c0_i32 = arith.constant 0 : i32
    %c0_i32_0 = arith.constant 0 : i32
    return %arg0, %c0_i32 : i32, i32
  }
  func.func @transform_2(%arg0: i32) -> (i32, i32) {
    %c0_i32 = arith.constant 0 : i32
    %c0_i32_0 = arith.constant 0 : i32
    %c0_i32_1 = arith.constant 0 : i32
    return %c0_i32, %c0_i32_0 : i32, i32
  }
  func.func @transform_3(%arg0: i32) -> (i32, i32) {
    %c0_i32 = arith.constant 0 : i32
    %c0_i32_0 = arith.constant 0 : i32
    %c0_i32_1 = arith.constant 0 : i32
    return %c0_i32, %c0_i32_0 : i32, i32
  }
  func.func @transform_4(%arg0: i32) -> (i32, i32) {
    %c0_i32 = arith.constant 0 : i32
    %c0_i32_0 = arith.constant 0 : i32
    %c0_i32_1 = arith.constant 0 : i32
    return %c0_i32, %c0_i32_0 : i32, i32
  }
  func.func @transform_5(%arg0: i32) -> (i32, i32) {
    %c0_i32 = arith.constant 0 : i32
    %c0_i32_0 = arith.constant 0 : i32
    %c0_i32_1 = arith.constant 0 : i32
    return %c0_i32, %c0_i32_0 : i32, i32
  }
  func.func @transform_6(%arg0: i32) -> (i32, i32) {
    %c0_i32 = arith.constant 0 : i32
    %c0_i32_0 = arith.constant 0 : i32
    return %arg0, %c0_i32 : i32, i32
  }
}

</mosaic_0001>

<llo_original>
// kernel: masked_residual_block.1
$region0: #{masked_residual_block.1}
  #allocation0 [shape = 'u32[]', space=smem, size = 0x4, offset = 0x4, fixed_abs, tag = 'smem constant byte address 0x4 - core index']
  #allocation1 [shape = 'u32[144,128]{1,0:T(1,128)}', space=vmem, size = 0x12000, scoped, tag = 'internal scratch']
  %s0 = inlined_call_operand.vmem [shape: f32[8,128], index: 0, kind: input, shape index: {}]
  %s1 = inlined_call_operand.vmem [shape: f32[8,128], index: 1, kind: input, shape index: {}]
  %s2 = inlined_call_operand.vmem [shape: f32[256,128], index: 2, kind: input, shape index: {}]
  %s3 = inlined_call_operand.vmem [shape: f32[1,128], index: 3, kind: input, shape index: {}]
  %s4 = inlined_call_operand.vmem [shape: f32[128,128], index: 4, kind: input, shape index: {}]
  %s5 = inlined_call_operand.vmem [shape: f32[1,128], index: 5, kind: input, shape index: {}]
  %s6 = inlined_call_operand.hbm [shape: f32[8,128], index: 6, kind: output, shape index: {}]
  %s7 = sld [smem:[#allocation0]]
  $region34: #{masked_residual_block.1} parent=0
    _
  %s9 = ssub.s32 1, %s7
  %s10 = scalar_select 0, %s9, %s7
  $region1: #{masked_residual_block.1} parent=0
    #allocation2 [shape = 'u8[4096]{0}', space=vmem, size = 0x1000, scoped, tag = 'output window, operand 0, single buffered']
    #allocation3 [shape = 's32[1]{0}', space=sflag, size = 0x4, scoped, tag = 'scoped memory for masked_residual_block.1']
    %11 = vsyncpa [#allocation3], 0
    // Predicated region
    $region2: #{masked_residual_block.1} parent=1 // pred_check
      _
    $region3: #{masked_residual_block.1} parent=1 // pred_check_branch
      %13 = sbr.rel (0) target = $region5
    $region4: #{masked_residual_block.1} parent=1 // pred_region
      _
    $region5: #{masked_residual_block.1} parent=1 // pred_fallthru
      _
    // Predicated region
    $region6: #{masked_residual_block.1} parent=1 // pred_check
      _
    $region7: #{masked_residual_block.1} parent=1 // pred_check_branch
      %15 = sbr.rel (0) target = $region9
    $region8: #{masked_residual_block.1} parent=1 // pred_region
      _
    $region9: #{masked_residual_block.1} parent=1 // pred_fallthru
      _
    // Predicated region
    $region10: #{masked_residual_block.1} parent=1 // pred_check
      _
    $region11: #{masked_residual_block.1} parent=1 // pred_check_branch
      %17 = sbr.rel (0) target = $region13
    $region12: #{masked_residual_block.1} parent=1 // pred_region
      _
    $region13: #{masked_residual_block.1} parent=1 // pred_fallthru
      _
    // Predicated region
    $region14: #{masked_residual_block.1} parent=1 // pred_check
      _
    $region15: #{masked_residual_block.1} parent=1 // pred_check_branch
      %19 = sbr.rel (0) target = $region17
    $region16: #{masked_residual_block.1} parent=1 // pred_region
      _
    $region17: #{masked_residual_block.1} parent=1 // pred_fallthru
      _
    // Predicated region
    $region18: #{masked_residual_block.1} parent=1 // pred_check
      _
    $region19: #{masked_residual_block.1} parent=1 // pred_check_branch
      %21 = sbr.rel (0) target = $region21
    $region20: #{masked_residual_block.1} parent=1 // pred_region
      _
    $region21: #{masked_residual_block.1} parent=1 // pred_fallthru
      _
    // Predicated region
    $region22: #{masked_residual_block.1} parent=1 // pred_check
      _
    $region23: #{masked_residual_block.1} parent=1 // pred_check_branch
      %23 = sbr.rel (0) target = $region25
    $region24: #{masked_residual_block.1} parent=1 // pred_region
      _
    $region25: #{masked_residual_block.1} parent=1 // pred_fallthru
      _
    %v24 = vld [vmem:[%s0] sm:$0xff]
    %v25 = vmax.f32 %v24, 0.0
    %v26 = vld [vmem:[%s1] sm:$0xff]
    %v27 = vld [vmem:[%s2] sm:$0xff]
    %v28 = vld [vmem:[%s2 + $0x8] sm:$0xff]
    %v29 = vld [vmem:[%s2 + $0x10] sm:$0xff]
    %v30 = vld [vmem:[%s2 + $0x18] sm:$0xff]
    %v31 = vld [vmem:[%s2 + $0x20] sm:$0xff]
    %v32 = vld [vmem:[%s2 + $0x28] sm:$0xff]
    %v33 = vld [vmem:[%s2 + $0x30] sm:$0xff]
    %v34 = vld [vmem:[%s2 + $0x38] sm:$0xff]
    %v35 = vld [vmem:[%s2 + $0x40] sm:$0xff]
    %v36 = vld [vmem:[%s2 + $0x48] sm:$0xff]
    %v37 = vld [vmem:[%s2 + $0x50] sm:$0xff]
    %v38 = vld [vmem:[%s2 + $0x58] sm:$0xff]
    %v39 = vld [vmem:[%s2 + $0x60] sm:$0xff]
    %v40 = vld [vmem:[%s2 + $0x68] sm:$0xff]
    %v41 = vld [vmem:[%s2 + $0x70] sm:$0xff]
    %v42 = vld [vmem:[%s2 + $0x78] sm:$0xff]
    %v43 = vld [vmem:[%s2 + $0x80] sm:$0xff]
    %v44 = vld [vmem:[%s2 + $0x88] sm:$0xff]
    %v45 = vld [vmem:[%s2 + $0x90] sm:$0xff]
    %v46 = vld [vmem:[%s2 + $0x98] sm:$0xff]
    %v47 = vld [vmem:[%s2 + $0xa0] sm:$0xff]
    %v48 = vld [vmem:[%s2 + $0xa8] sm:$0xff]
    %v49 = vld [vmem:[%s2 + $0xb0] sm:$0xff]
    %v50 = vld [vmem:[%s2 + $0xb8] sm:$0xff]
    %v51 = vld [vmem:[%s2 + $0xc0] sm:$0xff]
    %v52 = vld [vmem:[%s2 + $0xc8] sm:$0xff]
    %v53 = vld [vmem:[%s2 + $0xd0] sm:$0xff]
    %v54 = vld [vmem:[%s2 + $0xd8] sm:$0xff]
    %v55 = vld [vmem:[%s2 + $0xe0] sm:$0xff]
    %v56 = vld [vmem:[%s2 + $0xe8] sm:$0xff]
    %v57 = vld [vmem:[%s2 + $0xf0] sm:$0xff]
    %v58 = vld [vmem:[%s2 + $0xf8] sm:$0xff]
    %v59 = vld [vmem:[%s3] sm:$0x1]
    %v61 = vlaneseq
    %v62 = vshrl.u32 %v61, 7
    %v63 = vsub.s32 0, %v62
    %v64 = vrot.slane %v59, %v63
    %66 = vmatprep.subr.mxu0 0.0
    %67 = vmatpush1.msra.mxu0 %v42
    %68 = vmatprep.subr.mxu0 0.0
    %69 = vmatpush1.msra.mxu0 %v41
    %70 = vmatprep.subr.mxu0 0.0
    %71 = vmatpush1.msra.mxu0 %v40
    %72 = vmatprep.subr.mxu0 0.0
    %73 = vmatpush1.msra.mxu0 %v39
    %74 = vmatprep.subr.mxu0 0.0
    %75 = vmatpush1.msra.mxu0 %v38
    %76 = vmatprep.subr.mxu0 0.0
    %77 = vmatpush1.msra.mxu0 %v37
    %78 = vmatprep.subr.mxu0 0.0
    %79 = vmatpush1.msra.mxu0 %v36
    %80 = vmatprep.subr.mxu0 0.0
    %81 = vmatpush1.msra.mxu0 %v35
    %82 = vmatprep.subr.mxu0 0.0
    %83 = vmatpush1.msra.mxu0 %v34
    %84 = vmatprep.subr.mxu0 0.0
    %85 = vmatpush1.msra.mxu0 %v33
    %86 = vmatprep.subr.mxu0 0.0
    %87 = vmatpush1.msra.mxu0 %v32
    %88 = vmatprep.subr.mxu0 0.0
    %89 = vmatpush1.msra.mxu0 %v31
    %90 = vmatprep.subr.mxu0 0.0
    %91 = vmatpush1.msra.mxu0 %v30
    %92 = vmatprep.subr.mxu0 0.0
    %93 = vmatpush1.msra.mxu0 %v29
    %94 = vmatprep.subr.mxu0 0.0
    %95 = vmatpush1.msra.mxu0 %v28
    %96 = vmatprep.subr.mxu0 0.0
    %97 = vmatpush1.msra.mxu0 %v27
    %98 = vmatprep.subr.mxu0 0.0
    %99 = vmatpush2.msra.mxu0 %v58
    %100 = vmatprep.subr.mxu0 0.0
    %101 = vmatpush2.msra.mxu0 %v57
    %102 = vmatprep.subr.mxu0 0.0
    %103 = vmatpush2.msra.mxu0 %v56
    %104 = vmatprep.subr.mxu0 0.0
    %105 = vmatpush2.msra.mxu0 %v55
    %106 = vmatprep.subr.mxu0 0.0
    %107 = vmatpush2.msra.mxu0 %v54
    %108 = vmatprep.subr.mxu0 0.0
    %109 = vmatpush2.msra.mxu0 %v53
    %110 = vmatprep.subr.mxu0 0.0
    %111 = vmatpush2.msra.mxu0 %v52
    %112 = vmatprep.subr.mxu0 0.0
    %113 = vmatpush2.msra.mxu0 %v51
    %114 = vmatprep.subr.mxu0 0.0
    %115 = vmatpush2.msra.mxu0 %v50
    %116 = vmatprep.subr.mxu0 0.0
    %117 = vmatpush2.msra.mxu0 %v49
    %118 = vmatprep.subr.mxu0 0.0
    %119 = vmatpush2.msra.mxu0 %v48
    %120 = vmatprep.subr.mxu0 0.0
    %121 = vmatpush2.msra.mxu0 %v47
    %122 = vmatprep.subr.mxu0 0.0
    %123 = vmatpush2.msra.mxu0 %v46
    %124 = vmatprep.subr.mxu0 0.0
    %125 = vmatpush2.msra.mxu0 %v45
    %126 = vmatprep.subr.mxu0 0.0
    %127 = vmatpush2.msra.mxu0 %v44
    %128 = vmatprep.subr.mxu0 0.0
    %129 = vmatpush2.msra.mxu0 %v43
    %130 = vmatprep.mubr.f32.mxu0 %v26
    %131 = vmatmul.mubr.f32.gmra.mxu0 %v25
    %v132 = vpop.f32.mrf.mxu0
    %v133 = vadd.f32 %v64, %v132
    %v134 = vpop.f32.mrf.mxu0
    %135 = vdwg.mxu0
    %v136 = vmax.f32 %v133, 0.0
    %v137 = vld [vmem:[%s4] sm:$0xff]
    %v138 = vld [vmem:[%s4 + $0x8] sm:$0xff]
    %v139 = vld [vmem:[%s4 + $0x10] sm:$0xff]
    %v140 = vld [vmem:[%s4 + $0x18] sm:$0xff]
    %v141 = vld [vmem:[%s4 + $0x20] sm:$0xff]
    %v142 = vld [vmem:[%s4 + $0x28] sm:$0xff]
    %v143 = vld [vmem:[%s4 + $0x30] sm:$0xff]
    %v144 = vld [vmem:[%s4 + $0x38] sm:$0xff]
    %v145 = vld [vmem:[%s4 + $0x40] sm:$0xff]
    %v146 = vld [vmem:[%s4 + $0x48] sm:$0xff]
    %v147 = vld [vmem:[%s4 + $0x50] sm:$0xff]
    %v148 = vld [vmem:[%s4 + $0x58] sm:$0xff]
    %v149 = vld [vmem:[%s4 + $0x60] sm:$0xff]
    %v150 = vld [vmem:[%s4 + $0x68] sm:$0xff]
    %v151 = vld [vmem:[%s4 + $0x70] sm:$0xff]
    %v152 = vld [vmem:[%s4 + $0x78] sm:$0xff]
    %v153 = vld [vmem:[%s5] sm:$0x1]
    %v155 = vlaneseq
    %v156 = vshrl.u32 %v155, 7
    %v157 = vsub.s32 0, %v156
    %v158 = vrot.slane %v153, %v157
    %160 = vmatprep.subr.mxu0 0.0
    %161 = vmatpush1.msra.mxu0 %v152
    %162 = vmatprep.subr.mxu0 0.0
    %163 = vmatpush1.msra.mxu0 %v151
    %164 = vmatprep.subr.mxu0 0.0
    %165 = vmatpush1.msra.mxu0 %v150
    %166 = vmatprep.subr.mxu0 0.0
    %167 = vmatpush1.msra.mxu0 %v149
    %168 = vmatprep.subr.mxu0 0.0
    %169 = vmatpush1.msra.mxu0 %v148
    %170 = vmatprep.subr.mxu0 0.0
    %171 = vmatpush1.msra.mxu0 %v147
    %172 = vmatprep.subr.mxu0 0.0
    %173 = vmatpush1.msra.mxu0 %v146
    %174 = vmatprep.subr.mxu0 0.0
    %175 = vmatpush1.msra.mxu0 %v145
    %176 = vmatprep.subr.mxu0 0.0
    %177 = vmatpush1.msra.mxu0 %v144
    %178 = vmatprep.subr.mxu0 0.0
    %179 = vmatpush1.msra.mxu0 %v143
    %180 = vmatprep.subr.mxu0 0.0
    %181 = vmatpush1.msra.mxu0 %v142
    %182 = vmatprep.subr.mxu0 0.0
    %183 = vmatpush1.msra.mxu0 %v141
    %184 = vmatprep.subr.mxu0 0.0
    %185 = vmatpush1.msra.mxu0 %v140
    %186 = vmatprep.subr.mxu0 0.0
    %187 = vmatpush1.msra.mxu0 %v139
    %188 = vmatprep.subr.mxu0 0.0
    %189 = vmatpush1.msra.mxu0 %v138
    %190 = vmatprep.subr.mxu0 0.0
    %191 = vmatpush1.msra.mxu0 %v137
    %192 = vmatprep.subr.mxu0 0.0
    %193 = vmatpush2.msra.mxu0 0.0
    %194 = vmatprep.subr.mxu0 0.0
    %195 = vmatpush2.msra.mxu0 0.0
    %196 = vmatprep.subr.mxu0 0.0
    %197 = vmatpush2.msra.mxu0 0.0
    %198 = vmatprep.subr.mxu0 0.0
    %199 = vmatpush2.msra.mxu0 0.0
    %200 = vmatprep.subr.mxu0 0.0
    %201 = vmatpush2.msra.mxu0 0.0
    %202 = vmatprep.subr.mxu0 0.0
    %203 = vmatpush2.msra.mxu0 0.0
    %204 = vmatprep.subr.mxu0 0.0
    %205 = vmatpush2.msra.mxu0 0.0
    %206 = vmatprep.subr.mxu0 0.0
    %207 = vmatpush2.msra.mxu0 0.0
    %208 = vmatprep.subr.mxu0 0.0
    %209 = vmatpush2.msra.mxu0 0.0
    %210 = vmatprep.subr.mxu0 0.0
    %211 = vmatpush2.msra.mxu0 0.0
    %212 = vmatprep.subr.mxu0 0.0
    %213 = vmatpush2.msra.mxu0 0.0
    %214 = vmatprep.subr.mxu0 0.0
    %215 = vmatpush2.msra.mxu0 0.0
    %216 = vmatprep.subr.mxu0 0.0
    %217 = vmatpush2.msra.mxu0 0.0
    %218 = vmatprep.subr.mxu0 0.0
    %219 = vmatpush2.msra.mxu0 0.0
    %220 = vmatprep.subr.mxu0 0.0
    %221 = vmatpush2.msra.mxu0 0.0
    %222 = vmatprep.subr.mxu0 0.0
    %223 = vmatpush2.msra.mxu0 0.0
    %224 = vmatprep.mubr.f32.mxu0 0.0
    %225 = vmatmul.mubr.f32.gmra.mxu0 %v136
    %v226 = vpop.f32.mrf.mxu0
    %v227 = vadd.f32 %v158, %v226
    %v228 = vpop.f32.mrf.mxu0
    %229 = vdwg.mxu0
    %v230 = vadd.f32 %v24, %v227
    %231 = vst [vmem:[#allocation2] sm:$0xff] %v230
    // Predicated region
    $region26: #{masked_residual_block.1} parent=1 // pred_check
      _
    $region27: #{masked_residual_block.1} parent=1 // pred_check_branch
      %233 = sbr.rel (0) target = $region29
    $region28: #{masked_residual_block.1} parent=1 // pred_region
      %s235 = ssub.s32 128, 128
      %236 = vsyncadd [#allocation3], %s235
      %s238 = sshll.u32 [#allocation2], 4
      %s239 = int_to_ptr.vmem [resolvable:$true] %s238
      %241 = dma.vmem_to_hbm [thread:$0]  %s239, 128, %s6, [#allocation3]
    $region29: #{masked_residual_block.1} parent=1 // pred_fallthru
      _
    // Predicated region
    $region30: #{masked_residual_block.1} parent=1 // pred_check
      _
    $region31: #{masked_residual_block.1} parent=1 // pred_check_branch
      %243 = sbr.rel (0) target = $region33
    $region32: #{masked_residual_block.1} parent=1 // pred_region
      %244 = dma.done [#allocation3], 128
    $region33: #{masked_residual_block.1} parent=1 // pred_fallthru
      _
    %245 = vsyncpa [#allocation3], 1

</llo_original>
